<compile_context>
chip_gen: v7x
topology: tpu7x:2x2x1
jax: 0.10.0
libtpu: 0.0.40
codegen_flags: <defaults>
</compile_context>

<pallas_src>
import math

import jax
import jax.numpy as jnp
import numpy as np
from jax import lax
from jax.experimental import pallas as pl
from jax.experimental.pallas import tpu as pltpu


def _apply_kernel(x_ref, m_ref, o_ref):
    """out = x * pre-scaled keep mask for one lane-dense (TB, cols) tile."""
    o_ref[...] = x_ref[...] * m_ref[...]


def _vmem_limit_bytes():
    # Physical VMEM per TensorCore: 128 MiB on v5e/v6e, 64 MiB on v7x.
    try:
        phys = pltpu.get_tpu_info().vmem_capacity_bytes
    except Exception:
        phys = 64 * 1024 * 1024          # conservative (v7x-safe) fallback
    return min(phys // 2, 100 * 1024 * 1024)


def _pick_group(nc, hw):
    """Smallest g with (g*hw) % 128 == 0 and g | nc, so cols are lane-dense."""
    g0 = 128 // math.gcd(hw, 128)
    for k in range(1, 65):
        g = g0 * k
        if g > nc:
            break
        if nc % g == 0:
            return g
    return 1   # fall back: cols == hw (full-dim block is still legal/correct)


def dropblock(x, *, n, p, key, training=True):
    """JAX/Pallas equivalent of DropBlock(n, p).forward(x) in training mode."""
    gamma = p / (n ** 2)
    if not training or gamma <= 0:
        return x

    N, C, H, W = x.shape
    NC, HW = N * C, H * W

    # ---- tiny (H, W) pre-scaled keep mask, computed in the wrapper ----------
    # PyTorch: max_pool2d(pad=n//2) then crop last row/col for even n, which is
    # equivalent to asymmetric padding (n//2, n-1-n//2). Zero/-inf padding are
    # equivalent since centers are in {0,1} and every window hits real pixels.
    centers = (jax.random.uniform(key, (H, W)) < gamma).astype(jnp.float32)
    lo = n // 2
    hi = n - 1 - lo
    pooled = lax.reduce_window(
        centers, -jnp.inf, lax.max,
        window_dimensions=(n, n), window_strides=(1, 1),
        padding=((lo, hi), (lo, hi)))
    blocks = 1.0 - pooled
    scale = jnp.float32(H * W) / jnp.sum(blocks)     # inf/NaN like PyTorch if all dropped
    mask = (blocks * scale).astype(x.dtype)          # native-dtype multiply in kernel

    # ---- lane-dense flattening: (rows, cols) with cols % 128 == 0 if possible
    g = _pick_group(NC, HW)
    rows, cols = NC // g, g * HW
    xf = x.reshape(rows, cols)
    mask_row = jnp.tile(mask.reshape(1, HW), (1, g))  # (1, cols), shared across rows

    # ---- tile sizing: memory-bound; fill VMEM but keep >= ~4 grid steps -----
    itemsize = jnp.dtype(x.dtype).itemsize
    sub = max(8, 32 // itemsize)                      # sublane multiple (8/16/32)
    vmem_limit = _vmem_limit_bytes()
    row_bytes = cols * itemsize
    # 2x double-buffered input tiles + 2x output tiles ~= 4 tiles; use ~70%.
    max_tb = max(sub, ((vmem_limit * 7 // 10) // (4 * row_bytes)) // sub * sub)

    if rows >= sub:
        tb = min(max_tb, rows)
        if rows >= 4 * sub:            # >=4 steps: pipelining + both v7x cores
            tb = min(tb, pl.cdiv(rows, 4))
        elif rows >= 2 * sub:
            tb = min(tb, pl.cdiv(rows, 2))
        tb = max(sub, (tb // sub) * sub)
        # prefer a TB that divides rows so the last tile is not ragged/masked
        if rows % tb != 0:
            for cand in range(tb, sub - 1, -sub):
                if rows % cand == 0 and cand * 2 >= tb:
                    tb = cand
                    break
    else:
        tb = rows                       # tiny input: single full-extent block

    grid = (pl.cdiv(rows, tb),)
    cost = pl.CostEstimate(
        flops=rows * cols,
        bytes_accessed=2 * rows * cols * itemsize + cols * itemsize,
        transcendentals=0)

    y = pl.pallas_call(
        _apply_kernel,
        grid=grid,
        in_specs=[
            pl.BlockSpec((tb, cols), lambda b: (b, 0)),
            pl.BlockSpec((1, cols), lambda b: (0, 0)),
        ],
        out_specs=pl.BlockSpec((tb, cols), lambda b: (b, 0)),
        out_shape=jax.ShapeDtypeStruct((rows, cols), x.dtype),
        compiler_params=pltpu.CompilerParams(
            dimension_semantics=("parallel",),   # shard grid across TCs (v7x)
            vmem_limit_bytes=vmem_limit),
        cost_estimate=cost,
    )(xf, mask_row)
    return y.reshape(N, C, H, W)


def _dropblock_reference(x, *, n, p, key):
    """Pure-JAX reference mirroring the PyTorch forward (same centers)."""
    gamma = p / (n ** 2)
    N, C, H, W = x.shape
    centers = (jax.random.uniform(key, (H, W)) < gamma).astype(jnp.float32)
    lo = n // 2
    hi = n - 1 - lo
    pooled = lax.reduce_window(
        centers, -jnp.inf, lax.max,
        window_dimensions=(n, n), window_strides=(1, 1),
        padding=((lo, hi), (lo, hi)))
    blocks = 1.0 - pooled
    scale = (H * W) / jnp.sum(blocks)
    return x * blocks[None, None, :, :] * scale


if __name__ == "__main__":
    key = jax.random.PRNGKey(0)
    kx, km = jax.random.split(key)

    N, C, H, W = 2, 4, 16, 16
    n_block, p_drop = 3, 0.9            # gamma = 0.1

    x = jax.random.normal(kx, (N, C, H, W), dtype=jnp.float32)

    y = dropblock(x, n=n_block, p=p_drop, key=km, training=True)
    y = jax.block_until_ready(y)

    y_ref = _dropblock_reference(x, n=n_block, p=p_drop, key=km)
    assert y.shape == x.shape and y.dtype == x.dtype
    assert np.allclose(np.asarray(y), np.asarray(y_ref), rtol=1e-5, atol=1e-5)

    print("KERNEL_OK")
</pallas_src>

<mosaic_0001>
module attributes {stable_mosaic.version = 11 : i64} {
  func.func @_apply_kernel(%arg0: i32, %arg1: memref<8x256xf32, #tpu.memory_space<vmem>>, %arg2: memref<1x256xf32, #tpu.memory_space<vmem>>, %arg3: memref<8x256xf32, #tpu.memory_space<vmem>>) attributes {dimension_semantics = [#tpu.dimension_semantics<parallel>], iteration_bounds = array<i64: 1>, scalar_prefetch = 0 : i64, scratch_operands = 0 : i64, tpu.core_type = #tpu.core_type<tc>, window_params = [{transform_indices = @transform_0, window_bounds = array<i64: 8, 256>}, {pipeline_mode = #tpu.pipeline_mode<synchronous>, transform_indices = @transform_1, window_bounds = array<i64: 1, 256>}, {transform_indices = @transform_2, window_bounds = array<i64: 8, 256>}]} {
    %c0 = arith.constant 0 : index
    %c0_0 = arith.constant 0 : index
    %0 = vector.load %arg1[%c0, %c0_0] : memref<8x256xf32, #tpu.memory_space<vmem>>, vector<8x256xf32>
    %c0_1 = arith.constant 0 : index
    %c0_2 = arith.constant 0 : index
    %1 = vector.load %arg2[%c0_1, %c0_2] : memref<1x256xf32, #tpu.memory_space<vmem>>, vector<1x256xf32>
    %2 = vector.broadcast %1 : vector<1x256xf32> to vector<8x256xf32>
    %3 = arith.mulf %0, %2 : vector<8x256xf32>
    %c0_3 = arith.constant 0 : index
    %c0_4 = arith.constant 0 : index
    %4 = vector.load %arg3[%c0_3, %c0_4] : memref<8x256xf32, #tpu.memory_space<vmem>>, vector<8x256xf32>
    tpu.vector_store %arg3[%c0_3, %c0_4], %3 {strides = array<i32>} : memref<8x256xf32, #tpu.memory_space<vmem>>, vector<8x256xf32>,
    return
  }
  func.func @transform_0(%arg0: i32) -> (i32, i32) {
    %c0_i32 = arith.constant 0 : i32
    %c0_i32_0 = arith.constant 0 : i32
    return %arg0, %c0_i32 : i32, i32
  }
  func.func @transform_1(%arg0: i32) -> (i32, i32) {
    %c0_i32 = arith.constant 0 : i32
    %c0_i32_0 = arith.constant 0 : i32
    %c0_i32_1 = arith.constant 0 : i32
    return %c0_i32, %c0_i32_0 : i32, i32
  }
  func.func @transform_2(%arg0: i32) -> (i32, i32) {
    %c0_i32 = arith.constant 0 : i32
    %c0_i32_0 = arith.constant 0 : i32
    return %arg0, %c0_i32 : i32, i32
  }
}

</mosaic_0001>

<llo_original>
// kernel: tpu_custom_call.1
$region0: #{tpu_custom_call.1}
  #allocation0 [shape = 'u32[]', space=smem, size = 0x4, offset = 0x4, fixed_abs, tag = 'smem constant byte address 0x4 - core index']
  #allocation1 [shape = 'u32[144,128]{1,0:T(1,128)}', space=vmem, size = 0x12000, scoped, tag = 'internal scratch']
  %s0 = inlined_call_operand.hbm [shape: f32[8,256], index: 0, kind: input, shape index: {}]
  %s1 = inlined_call_operand.vmem [shape: f32[1,256], index: 1, kind: input, shape index: {}]
  %s2 = inlined_call_operand.hbm [shape: f32[8,256], index: 2, kind: output, shape index: {}]
  %s3 = sld [smem:[#allocation0]]
  $region22: #{tpu_custom_call.1} parent=0
    _
  %s5 = ssub.s32 1, %s3
  %s6 = scalar_select 0, %s5, %s3
  $region1: #{tpu_custom_call.1} parent=0
    #allocation2 [shape = 'u8[8192]{0}', space=vmem, size = 0x2000, scoped, tag = 'input window, operand 0, single buffered']
    #allocation3 [shape = 's32[1]{0}', space=sflag, size = 0x4, scoped, tag = 'scoped memory for tpu_custom_call.1']
    #allocation4 [shape = 's32[1]{0}', space=sflag, size = 0x4, scoped, tag = 'scoped memory for tpu_custom_call.1']
    #allocation5 [shape = 'u8[8192]{0}', space=vmem, size = 0x2000, scoped, tag = 'output window, operand 0, single buffered']
    %7 = vsyncpa [#allocation3], 0
    %8 = vsyncpa [#allocation4], 0
    // Predicated region
    $region2: #{tpu_custom_call.1} parent=1 // pred_check
      _
    $region3: #{tpu_custom_call.1} parent=1 // pred_check_branch
      %10 = sbr.rel (0) target = $region5
    $region4: #{tpu_custom_call.1} parent=1 // pred_region
      %s12 = ssub.s32 256, 256
      %13 = vsyncadd [#allocation3], %s12
      %s15 = sshll.u32 [#allocation2], 4
      %s16 = int_to_ptr.vmem [resolvable:$true] %s15
      %18 = dma.hbm_to_vmem [thread:$0]  %s0, 256, %s16, [#allocation3]
    $region5: #{tpu_custom_call.1} parent=1 // pred_fallthru
      _
    // Predicated region
    $region6: #{tpu_custom_call.1} parent=1 // pred_check
      _
    $region7: #{tpu_custom_call.1} parent=1 // pred_check_branch
      %20 = sbr.rel (0) target = $region9
    $region8: #{tpu_custom_call.1} parent=1 // pred_region
      _
    $region9: #{tpu_custom_call.1} parent=1 // pred_fallthru
      _
    // Predicated region
    $region10: #{tpu_custom_call.1} parent=1 // pred_check
      _
    $region11: #{tpu_custom_call.1} parent=1 // pred_check_branch
      %22 = sbr.rel (0) target = $region13
    $region12: #{tpu_custom_call.1} parent=1 // pred_region
      %23 = dma.done [#allocation3], 256
    $region13: #{tpu_custom_call.1} parent=1 // pred_fallthru
      _
    %v24 = vld [vmem:[#allocation2] sm:$0xff]
    %v25 = vld [vmem:[#allocation2 + $0x8] sm:$0xff]
    %v26 = vld [vmem:[%s1] sm:$0x3]
    %v28 = vlaneseq
    %v29 = vshrl.u32 %v28, 7
    %v30 = vsub.s32 0, %v29
    %v31 = vrot.slane %v26, %v30
    %v32 = vlaneseq
    %v33 = vshrl.u32 %v32, 7
    %v34 = vsub.s32 1, %v33
    %v35 = vrot.slane %v26, %v34
    %v38 = vmul.f32 %v24, %v31
    %v39 = vmul.f32 %v25, %v35
    %40 = vst [vmem:[#allocation5] sm:$0xff] %v38
    %41 = vst [vmem:[#allocation5 + $0x8] sm:$0xff] %v39
    // Predicated region
    $region14: #{tpu_custom_call.1} parent=1 // pred_check
      _
    $region15: #{tpu_custom_call.1} parent=1 // pred_check_branch
      %43 = sbr.rel (0) target = $region17
    $region16: #{tpu_custom_call.1} parent=1 // pred_region
      %s45 = ssub.s32 256, 256
      %46 = vsyncadd [#allocation4], %s45
      %s48 = sshll.u32 [#allocation5], 4
      %s49 = int_to_ptr.vmem [resolvable:$true] %s48
      %51 = dma.vmem_to_hbm [thread:$0]  %s49, 256, %s2, [#allocation4]
    $region17: #{tpu_custom_call.1} parent=1 // pred_fallthru
      _
    // Predicated region
    $region18: #{tpu_custom_call.1} parent=1 // pred_check
      _
    $region19: #{tpu_custom_call.1} parent=1 // pred_check_branch
      %53 = sbr.rel (0) target = $region21
    $region20: #{tpu_custom_call.1} parent=1 // pred_region
      %54 = dma.done [#allocation4], 256
    $region21: #{tpu_custom_call.1} parent=1 // pred_fallthru
      _
    %55 = vsyncpa [#allocation3], 1
    %56 = vsyncpa [#allocation4], 1

</llo_original>
